<compile_context>
chip_gen: v6e
topology: v6e:2x2x1
jax: 0.10.0
libtpu: 0.0.40
codegen_flags: <defaults>
</compile_context>

<pallas_src>
import functools

import jax
import jax.numpy as jnp
from jax import lax
from jax.experimental import pallas as pl
from jax.experimental.pallas import tpu as pltpu

ALPHA = 0.2  # LeakyReLU negative slope


# ----------------------------- k-NN (fused distance + top-k) -----------------------------

def _knn_kernel(q_ref, p_ref, idx_ref, *, k):
    # q_ref: (1, TQ, 3) query tile (point-major); p_ref: (1, 3, N) all points (channel-major)
    # idx_ref: (1, TQ, k) int32 indices of the k largest -||q_i - p_j||^2 (same as torch.topk).
    q = q_ref[0]                                   # (TQ, 3)
    p = p_ref[0]                                   # (3, N)
    n_all = p.shape[1]
    acc = None
    for c in range(3):                             # 3 VPU multiply-adds instead of a K=3 MXU dot
        d = q[:, c:c + 1] - p[c:c + 1, :]          # (TQ, N) outer difference
        acc = d * d if acc is None else acc + d * d
    neg = -acc                                     # -||q_i - p_j||^2  (reference sign convention)
    col = lax.broadcasted_iota(jnp.int32, neg.shape, 1).astype(jnp.float32)
    picks = []
    for _ in range(k):                             # iterative top-k (k small & static)
        m = jnp.max(neg, axis=1, keepdims=True)
        am = jnp.min(jnp.where(neg == m, col, jnp.float32(n_all)), axis=1, keepdims=True)
        picks.append(am.astype(jnp.int32))
        neg = jnp.where(col == am, jnp.float32(-1e30), neg)
    idx_ref[0] = jnp.concatenate(picks, axis=1)    # (TQ, k)


def knn_neighbors(feats_cn, k, tile_q=64):
    # feats_cn: (B, C, N). The reference knn() only uses the first 3 feature channels.
    B, _, N = feats_cn.shape
    tq = tile_q if (N % tile_q == 0) else N
    p = feats_cn[:, :3, :].astype(jnp.float32)     # (B, 3, N) gallery (tiny host slice/cast)
    q = jnp.transpose(p, (0, 2, 1))                # (B, N, 3) queries (tiny)
    idx = pl.pallas_call(
        functools.partial(_knn_kernel, k=k),
        out_shape=jax.ShapeDtypeStruct((B, N, k), jnp.int32),
        grid=(B, N // tq),
        in_specs=[
            pl.BlockSpec((1, tq, 3), lambda b, t: (b, t, 0)),
            pl.BlockSpec((1, 3, N), lambda b, t: (b, 0, 0)),
        ],
        out_specs=pl.BlockSpec((1, tq, k), lambda b, t: (b, t, 0)),
        compiler_params=pltpu.CompilerParams(
            dimension_semantics=("parallel", "parallel")),
    )(q, p)
    return jnp.transpose(idx, (0, 2, 1))           # (B, k, N) -- tiny int reorder for edge conv


# ----------------------------- edge conv (fused gather + single matmul) -----------------------------

def _edgeconv_kernel(idx_ref, x_ref, w1_ref, w2_ref, s_ref, t_ref, o_ref, *, k):
    # idx_ref: (1, k, N) int32; x_ref: (1, C, N); w1/w2: (Cout, C) bf16 (diff half / center half
    # of the reference 1x1 Conv2d weight); s/t: (Cout, 1) folded BatchNorm.
    x = x_ref[0].astype(jnp.float32)               # (C, N) gather source, unpacked f32
    idx = idx_ref[0]                               # (k, N)
    c_in, n = x.shape
    diffs = []
    for j in range(k):                             # in-VMEM lane gather, no HBM graph-feature tensor
        ij = jnp.broadcast_to(idx[j:j + 1, :], (c_in, n))
        gj = jnp.take_along_axis(x, ij, axis=1, mode="clip")
        diffs.append(gj - x)
    diff = jnp.concatenate(diffs, axis=1).astype(jnp.bfloat16)           # (C, k*N)
    y = jnp.dot(w1_ref[...], diff, preferred_element_type=jnp.float32)   # one MXU call, (Cout, k*N)
    base = jnp.dot(w2_ref[...], x.astype(jnp.bfloat16),
                   preferred_element_type=jnp.float32)                   # (Cout, N)
    s = s_ref[...]
    t = t_ref[...]
    acc = None
    for j in range(k):                             # f32 VPU epilogue + max over neighbors
        yj = y[:, j * n:(j + 1) * n] + base
        yj = yj * s + t
        yj = jnp.where(yj > 0, yj, ALPHA * yj)
        acc = yj if acc is None else jnp.maximum(acc, yj)
    o_ref[0] = acc.astype(o_ref.dtype)


def edge_conv(x_cn, idx_kn, w1, w2, scale, shift):
    # x_cn: (B, C, N), idx_kn: (B, k, N) -> (B, Cout, N) bf16
    B, C, N = x_cn.shape
    k = idx_kn.shape[1]
    cout = w1.shape[0]
    return pl.pallas_call(
        functools.partial(_edgeconv_kernel, k=k),
        out_shape=jax.ShapeDtypeStruct((B, cout, N), jnp.bfloat16),
        grid=(B,),
        in_specs=[
            pl.BlockSpec((1, k, N), lambda b: (b, 0, 0)),
            pl.BlockSpec((1, C, N), lambda b: (b, 0, 0)),
            pl.BlockSpec((cout, C), lambda b: (0, 0)),
            pl.BlockSpec((cout, C), lambda b: (0, 0)),
            pl.BlockSpec((cout, 1), lambda b: (0, 0)),
            pl.BlockSpec((cout, 1), lambda b: (0, 0)),
        ],
        out_specs=pl.BlockSpec((1, cout, N), lambda b: (b, 0, 0)),
        compiler_params=pltpu.CompilerParams(dimension_semantics=("parallel",)),
    )(idx_kn, x_cn, w1, w2, scale, shift)


# ----------------------------- head: conv5/6/7 + prior + Gumbel sampling -----------------------------

def _head_kernel(x1_ref, x2_ref, x3_ref, x4_ref,
                 w5a_ref, w5b_ref, w5c_ref, w5d_ref, s5_ref, t5_ref,
                 w6g_ref, w6a_ref, w6b_ref, w6c_ref, w6d_ref, s6_ref, t6_ref,
                 w7_ref, s7_ref, t7_ref,
                 pw_ref, ws_ref, bs_ref, gn_ref,
                 attn_ref, samp_ref, *, inv_tau, hard):
    f32 = jnp.float32

    def leaky(v):
        return jnp.where(v > 0, v, ALPHA * v)

    x1 = x1_ref[0]; x2 = x2_ref[0]; x3 = x3_ref[0]; x4 = x4_ref[0]      # (Ci, N) bf16

    # conv5 over concat(x1..x4) as partial-sum matmuls (no concat materialization)
    y5 = (jnp.dot(w5a_ref[...], x1, preferred_element_type=f32)
          + jnp.dot(w5b_ref[...], x2, preferred_element_type=f32)
          + jnp.dot(w5c_ref[...], x3, preferred_element_type=f32)
          + jnp.dot(w5d_ref[...], x4, preferred_element_type=f32))       # (E, N)
    y5 = leaky(y5 * s5_ref[...] + t5_ref[...])
    xg = jnp.max(y5, axis=1, keepdims=True)                              # (E, 1) global max-pool

    # conv6 over concat(global, x1..x4): the repeated global vector collapses to one column
    gcol = jnp.dot(w6g_ref[...].astype(f32), xg, preferred_element_type=f32)   # (512, 1)
    y6 = (gcol
          + jnp.dot(w6a_ref[...], x1, preferred_element_type=f32)
          + jnp.dot(w6b_ref[...], x2, preferred_element_type=f32)
          + jnp.dot(w6c_ref[...], x3, preferred_element_type=f32)
          + jnp.dot(w6d_ref[...], x4, preferred_element_type=f32))       # (512, N)
    y6 = leaky(y6 * s6_ref[...] + t6_ref[...])

    # conv7 + per-point prior weighting (prior is a lane-dense (1, N) row)
    y7 = jnp.dot(w7_ref[...], y6.astype(jnp.bfloat16),
                 preferred_element_type=f32)                             # (256, N)
    y7 = leaky(y7 * s7_ref[...] + t7_ref[...])
    x7p = y7 * pw_ref[0]                                                 # (256, N)
    # TODO(synk): dropout is eval-mode identity here.

    # Gumbel softmax over the point axis (lanes), attn written directly as (S, N)
    logits = jnp.dot(ws_ref[...], x7p, preferred_element_type=f32) + bs_ref[...]   # (S, N)
    z = (logits + gn_ref[0]) * inv_tau
    z = z - jnp.max(z, axis=1, keepdims=True)
    p = jnp.exp(z)
    attn = p * pl.reciprocal(jnp.sum(p, axis=1, keepdims=True), approx=True)
    if hard:
        # Straight-through forward value: one-hot of the per-row argmax (ties -> first index),
        # numerically equal to F.gumbel_softmax(..., hard=True) in the forward pass.
        col = lax.broadcasted_iota(jnp.float32, attn.shape, 1)
        m = jnp.max(attn, axis=1, keepdims=True)
        am = jnp.min(jnp.where(attn == m, col, jnp.float32(attn.shape[1])),
                     axis=1, keepdims=True)
        attn = jnp.where(col == am, jnp.float32(1.0), jnp.float32(0.0))
    attn_ref[0] = attn.astype(attn_ref.dtype)

    # sampled = attn @ x, emitted lane-dense as (S, 256); the host transposes the tiny
    # result to the reference (256, S) orientation.
    samp_ref[0] = lax.dot_general(
        attn, x7p, (((1,), (1,)), ((), ())),
        preferred_element_type=f32).astype(samp_ref.dtype)


def head_forward(x1, x2, x3, x4, params, prior_weight, gumbel, tau, hard):
    B, _, N = x1.shape
    S = params["ws"].shape[0]
    c7 = params["w7"].shape[0]
    pw = prior_weight.reshape(B, 1, N).astype(jnp.float32)
    ins = [x1, x2, x3, x4,
           params["w5a"], params["w5b"], params["w5c"], params["w5d"], params["s5"], params["t5"],
           params["w6g"], params["w6a"], params["w6b"], params["w6c"], params["w6d"],
           params["s6"], params["t6"],
           params["w7"], params["s7"], params["t7"],
           pw, params["ws"], params["bs"], gumbel]
    specs = []
    for a in ins:
        if a.ndim == 3:   # per-batch tensors
            specs.append(pl.BlockSpec((1,) + a.shape[1:], lambda b: (b, 0, 0)))
        else:             # weights / folded BN (full blocks, batch-invariant)
            specs.append(pl.BlockSpec(a.shape, lambda b: (0, 0)))
    attn, sampled_sn = pl.pallas_call(
        functools.partial(_head_kernel, inv_tau=1.0 / float(tau), hard=bool(hard)),
        out_shape=(jax.ShapeDtypeStruct((B, S, N), jnp.float32),
                   jax.ShapeDtypeStruct((B, S, c7), jnp.float32)),
        grid=(B,),
        in_specs=specs,
        out_specs=(pl.BlockSpec((1, S, N), lambda b: (b, 0, 0)),
                   pl.BlockSpec((1, S, c7), lambda b: (b, 0, 0))),
        compiler_params=pltpu.CompilerParams(dimension_semantics=("parallel",)),
    )(*ins)
    sampled = jnp.transpose(sampled_sn, (0, 2, 1))   # tiny (B, 256, S) reorder on host
    return sampled, attn


# ----------------------------- parameters & forward -----------------------------

def init_params(key, emb_dims=64, num_sampling=8):
    keys = iter(jax.random.split(key, 64))

    def w(cout, cin):
        return (jax.random.normal(next(keys), (cout, cin), jnp.float32)
                / jnp.sqrt(float(cin))).astype(jnp.bfloat16)

    def bn(c):  # folded eval-mode BatchNorm -> per-channel scale/shift columns
        gamma = 1.0 + 0.1 * jax.random.normal(next(keys), (c, 1), jnp.float32)
        beta = 0.1 * jax.random.normal(next(keys), (c, 1), jnp.float32)
        mean = 0.1 * jax.random.normal(next(keys), (c, 1), jnp.float32)
        var = 1.0 + 0.1 * jax.random.uniform(next(keys), (c, 1), jnp.float32)
        scale = gamma / jnp.sqrt(var + 1e-5)
        return scale, beta - mean * scale

    p = {}
    # conv1: Conv2d(2*3 -> 64, 1x1). Weight split into (feature - x) half and x half;
    # the Cin=3 contraction is zero-padded to 8 (MXU-friendly).
    w1a = jax.random.normal(next(keys), (64, 3), jnp.float32) / jnp.sqrt(3.0)
    w1b = jax.random.normal(next(keys), (64, 3), jnp.float32) / jnp.sqrt(3.0)
    p["c1_w1"] = jnp.pad(w1a, ((0, 0), (0, 5))).astype(jnp.bfloat16)
    p["c1_w2"] = jnp.pad(w1b, ((0, 0), (0, 5))).astype(jnp.bfloat16)
    p["c1_s"], p["c1_t"] = bn(64)
    p["c2_w1"], p["c2_w2"] = w(64, 64), w(64, 64)
    p["c2_s"], p["c2_t"] = bn(64)
    p["c3_w1"], p["c3_w2"] = w(128, 64), w(128, 64)
    p["c3_s"], p["c3_t"] = bn(128)
    p["c4_w1"], p["c4_w2"] = w(256, 128), w(256, 128)
    p["c4_s"], p["c4_t"] = bn(256)
    # conv5 (512 -> E): split along Cin into the x1/x2/x3/x4 chunks
    p["w5a"], p["w5b"] = w(emb_dims, 64), w(emb_dims, 64)
    p["w5c"], p["w5d"] = w(emb_dims, 128), w(emb_dims, 256)
    p["s5"], p["t5"] = bn(emb_dims)
    # conv6 (E+512 -> 512): split into global / x1 / x2 / x3 / x4 chunks
    p["w6g"], p["w6a"], p["w6b"] = w(512, emb_dims), w(512, 64), w(512, 64)
    p["w6c"], p["w6d"] = w(512, 128), w(512, 256)
    p["s6"], p["t6"] = bn(512)
    p["w7"] = w(256, 512)
    p["s7"], p["t7"] = bn(256)
    # GumbelSampling linear (stored as nn.Linear does: (out, in)), kept f32
    p["ws"] = jax.random.normal(next(keys), (num_sampling, 256), jnp.float32) / 16.0
    p["bs"] = 0.01 * jax.random.normal(next(keys), (num_sampling, 1), jnp.float32)
    # TODO(synk): StatisticsNet params omitted — stat_joint/stat_margin are None in the forward.
    return p


def info_sampling_forward(params, x, tau, hard, prior_weight, k, noise_key):
    # x: (B, 3, N) like the PyTorch module; prior_weight: (B, N)
    # TODO(synk): use_normals kNN weighting is not implemented (use_normals=False path only).
    B, _, N = x.shape
    x = x.astype(jnp.float32)
    x0 = jnp.pad(x, ((0, 0), (0, 5), (0, 0)))          # pad Cin 3 -> 8 for conv1's contraction

    # Note: matching the reference knn(), only the first 3 channels of each feature map
    # are used to build the graph for every edge conv.
    idx = knn_neighbors(x, k)
    x1 = edge_conv(x0, idx, params["c1_w1"], params["c1_w2"], params["c1_s"], params["c1_t"])
    idx = knn_neighbors(x1, k)
    x2 = edge_conv(x1, idx, params["c2_w1"], params["c2_w2"], params["c2_s"], params["c2_t"])
    idx = knn_neighbors(x2, k)
    x3 = edge_conv(x2, idx, params["c3_w1"], params["c3_w2"], params["c3_s"], params["c3_t"])
    idx = knn_neighbors(x3, k)
    x4 = edge_conv(x3, idx, params["c4_w1"], params["c4_w2"], params["c4_s"], params["c4_t"])

    S = params["ws"].shape[0]
    gnoise = jax.random.gumbel(noise_key, (B, S, N), jnp.float32)
    sampled, attn = head_forward(x1, x2, x3, x4, params, prior_weight, gnoise, tau, hard)
    return sampled, attn, None, None


# ----------------------------- demo -----------------------------

if __name__ == "__main__":
    B, N, K = 2, 128, 4
    EMB_DIMS, NUM_SAMPLING = 64, 8

    key = jax.random.PRNGKey(0)
    kp, kx, kw, kn = jax.random.split(key, 4)

    params = init_params(kp, emb_dims=EMB_DIMS, num_sampling=NUM_SAMPLING)
    x = jax.random.normal(kx, (B, 3, N), jnp.float32)
    prior_weight = jax.random.uniform(kw, (B, N), jnp.float32)

    sampled, attn, stat_joint, stat_margin = info_sampling_forward(
        params, x, tau=1.0, hard=False, prior_weight=prior_weight, k=K, noise_key=kn)

    jax.block_until_ready((sampled, attn))
    assert sampled.shape == (B, 256, NUM_SAMPLING)
    assert attn.shape == (B, NUM_SAMPLING, N)
    assert stat_joint is None and stat_margin is None
    assert bool(jnp.all(jnp.abs(jnp.sum(attn, axis=-1) - 1.0) < 1e-2))  # softmax rows ~ 1
    print("KERNEL_OK")
</pallas_src>

<mosaic_0001>
module attributes {stable_mosaic.version = 11 : i64} {
  func.func @_knn_kernel(%arg0: i32, %arg1: i32, %arg2: memref<1x64x3xf32, #tpu.memory_space<vmem>>, %arg3: memref<1x3x128xf32, #tpu.memory_space<vmem>>, %arg4: memref<1x64x4xi32, #tpu.memory_space<vmem>>) attributes {dimension_semantics = [#tpu.dimension_semantics<parallel>, #tpu.dimension_semantics<parallel>], iteration_bounds = array<i64: 2, 2>, scalar_prefetch = 0 : i64, scratch_operands = 0 : i64, tpu.core_type = #tpu.core_type<tc>, window_params = [{transform_indices = @transform_0, window_bounds = array<i64: 1, 64, 3>}, {transform_indices = @transform_1, window_bounds = array<i64: 1, 3, 128>}, {transform_indices = @transform_2, window_bounds = array<i64: 1, 64, 4>}]} {
    %c0 = arith.constant 0 : index
    %c0_0 = arith.constant 0 : index
    %c0_1 = arith.constant 0 : index
    %0 = vector.load %arg2[%c0, %c0_0, %c0_1] : memref<1x64x3xf32, #tpu.memory_space<vmem>>, vector<1x64x3xf32>
    %1 = vector.shape_cast %0 : vector<1x64x3xf32> to vector<64x3xf32>
    %c0_2 = arith.constant 0 : index
    %c0_3 = arith.constant 0 : index
    %c0_4 = arith.constant 0 : index
    %2 = vector.load %arg3[%c0_2, %c0_3, %c0_4] : memref<1x3x128xf32, #tpu.memory_space<vmem>>, vector<1x3x128xf32>
    %3 = vector.shape_cast %2 : vector<1x3x128xf32> to vector<3x128xf32>
    %4 = vector.extract_strided_slice %1 {offsets = [0, 0], sizes = [64, 1], strides = [1, 1]} : vector<64x3xf32> to vector<64x1xf32>
    %5 = vector.extract_strided_slice %3 {offsets = [0, 0], sizes = [1, 128], strides = [1, 1]} : vector<3x128xf32> to vector<1x128xf32>
    %6 = vector.broadcast %4 : vector<64x1xf32> to vector<64x128xf32>
    %7 = vector.broadcast %5 : vector<1x128xf32> to vector<64x128xf32>
    %8 = arith.subf %6, %7 : vector<64x128xf32>
    %9 = arith.mulf %8, %8 : vector<64x128xf32>
    %10 = vector.extract_strided_slice %1 {offsets = [0, 1], sizes = [64, 1], strides = [1, 1]} : vector<64x3xf32> to vector<64x1xf32>
    %11 = vector.extract_strided_slice %3 {offsets = [1, 0], sizes = [1, 128], strides = [1, 1]} : vector<3x128xf32> to vector<1x128xf32>
    %12 = vector.broadcast %10 : vector<64x1xf32> to vector<64x128xf32>
    %13 = vector.broadcast %11 : vector<1x128xf32> to vector<64x128xf32>
    %14 = arith.subf %12, %13 : vector<64x128xf32>
    %15 = arith.mulf %14, %14 : vector<64x128xf32>
    %16 = arith.addf %9, %15 : vector<64x128xf32>
    %17 = vector.extract_strided_slice %1 {offsets = [0, 2], sizes = [64, 1], strides = [1, 1]} : vector<64x3xf32> to vector<64x1xf32>
    %18 = vector.extract_strided_slice %3 {offsets = [2, 0], sizes = [1, 128], strides = [1, 1]} : vector<3x128xf32> to vector<1x128xf32>
    %19 = vector.broadcast %17 : vector<64x1xf32> to vector<64x128xf32>
    %20 = vector.broadcast %18 : vector<1x128xf32> to vector<64x128xf32>
    %21 = arith.subf %19, %20 : vector<64x128xf32>
    %22 = arith.mulf %21, %21 : vector<64x128xf32>
    %23 = arith.addf %16, %22 : vector<64x128xf32>
    %cst = arith.constant 0.000000e+00 : f32
    %24 = vector.broadcast %cst : f32 to vector<64x128xf32>
    %25 = arith.subf %24, %23 : vector<64x128xf32>
    %26 = tpu.iota {dimensions = array<i32: 1>} : vector<64x128xi32>
    %27 = arith.sitofp %26 : vector<64x128xi32> to vector<64x128xf32>
    %cst_5 = arith.constant dense<0xFF800000> : vector<64xf32>
    %28 = vector.multi_reduction <maximumf>, %25, %cst_5 [1] : vector<64x128xf32> to vector<64xf32>
    %29 = vector.shape_cast %28 : vector<64xf32> to vector<64x1xf32>
    %30 = vector.broadcast %29 : vector<64x1xf32> to vector<64x128xf32>
    %31 = arith.cmpf oeq, %25, %30 : vector<64x128xf32>
    %cst_6 = arith.constant 1.280000e+02 : f32
    %32 = vector.broadcast %cst_6 : f32 to vector<64x128xf32>
    %33 = arith.select %31, %27, %32 : vector<64x128xi1>, vector<64x128xf32>
    %cst_7 = arith.constant dense<0x7F800000> : vector<64xf32>
    %34 = vector.multi_reduction <minimumf>, %33, %cst_7 [1] : vector<64x128xf32> to vector<64xf32>
    %35 = vector.shape_cast %34 : vector<64xf32> to vector<64x1xf32>
    %36 = arith.fptosi %35 : vector<64x1xf32> to vector<64x1xi32>
    %37 = vector.broadcast %35 : vector<64x1xf32> to vector<64x128xf32>
    %38 = arith.cmpf oeq, %27, %37 : vector<64x128xf32>
    %cst_8 = arith.constant -1.000000e+30 : f32
    %39 = vector.broadcast %cst_8 : f32 to vector<64x128xf32>
    %40 = arith.select %38, %39, %25 : vector<64x128xi1>, vector<64x128xf32>
    %cst_9 = arith.constant dense<0xFF800000> : vector<64xf32>
    %41 = vector.multi_reduction <maximumf>, %40, %cst_9 [1] : vector<64x128xf32> to vector<64xf32>
    %42 = vector.shape_cast %41 : vector<64xf32> to vector<64x1xf32>
    %43 = vector.broadcast %42 : vector<64x1xf32> to vector<64x128xf32>
    %44 = arith.cmpf oeq, %40, %43 : vector<64x128xf32>
    %cst_10 = arith.constant 1.280000e+02 : f32
    %45 = vector.broadcast %cst_10 : f32 to vector<64x128xf32>
    %46 = arith.select %44, %27, %45 : vector<64x128xi1>, vector<64x128xf32>
    %cst_11 = arith.constant dense<0x7F800000> : vector<64xf32>
    %47 = vector.multi_reduction <minimumf>, %46, %cst_11 [1] : vector<64x128xf32> to vector<64xf32>
    %48 = vector.shape_cast %47 : vector<64xf32> to vector<64x1xf32>
    %49 = arith.fptosi %48 : vector<64x1xf32> to vector<64x1xi32>
    %50 = vector.broadcast %48 : vector<64x1xf32> to vector<64x128xf32>
    %51 = arith.cmpf oeq, %27, %50 : vector<64x128xf32>
    %cst_12 = arith.constant -1.000000e+30 : f32
    %52 = vector.broadcast %cst_12 : f32 to vector<64x128xf32>
    %53 = arith.select %51, %52, %40 : vector<64x128xi1>, vector<64x128xf32>
    %cst_13 = arith.constant dense<0xFF800000> : vector<64xf32>
    %54 = vector.multi_reduction <maximumf>, %53, %cst_13 [1] : vector<64x128xf32> to vector<64xf32>
    %55 = vector.shape_cast %54 : vector<64xf32> to vector<64x1xf32>
    %56 = vector.broadcast %55 : vector<64x1xf32> to vector<64x128xf32>
    %57 = arith.cmpf oeq, %53, %56 : vector<64x128xf32>
    %cst_14 = arith.constant 1.280000e+02 : f32
    %58 = vector.broadcast %cst_14 : f32 to vector<64x128xf32>
    %59 = arith.select %57, %27, %58 : vector<64x128xi1>, vector<64x128xf32>
    %cst_15 = arith.constant dense<0x7F800000> : vector<64xf32>
    %60 = vector.multi_reduction <minimumf>, %59, %cst_15 [1] : vector<64x128xf32> to vector<64xf32>
    %61 = vector.shape_cast %60 : vector<64xf32> to vector<64x1xf32>
    %62 = arith.fptosi %61 : vector<64x1xf32> to vector<64x1xi32>
    %63 = vector.broadcast %61 : vector<64x1xf32> to vector<64x128xf32>
    %64 = arith.cmpf oeq, %27, %63 : vector<64x128xf32>
    %cst_16 = arith.constant -1.000000e+30 : f32
    %65 = vector.broadcast %cst_16 : f32 to vector<64x128xf32>
    %66 = arith.select %64, %65, %53 : vector<64x128xi1>, vector<64x128xf32>
    %cst_17 = arith.constant dense<0xFF800000> : vector<64xf32>
    %67 = vector.multi_reduction <maximumf>, %66, %cst_17 [1] : vector<64x128xf32> to vector<64xf32>
    %68 = vector.shape_cast %67 : vector<64xf32> to vector<64x1xf32>
    %69 = vector.broadcast %68 : vector<64x1xf32> to vector<64x128xf32>
    %70 = arith.cmpf oeq, %66, %69 : vector<64x128xf32>
    %cst_18 = arith.constant 1.280000e+02 : f32
    %71 = vector.broadcast %cst_18 : f32 to vector<64x128xf32>
    %72 = arith.select %70, %27, %71 : vector<64x128xi1>, vector<64x128xf32>
    %cst_19 = arith.constant dense<0x7F800000> : vector<64xf32>
    %73 = vector.multi_reduction <minimumf>, %72, %cst_19 [1] : vector<64x128xf32> to vector<64xf32>
    %74 = vector.shape_cast %73 : vector<64xf32> to vector<64x1xf32>
    %75 = arith.fptosi %74 : vector<64x1xf32> to vector<64x1xi32>
    %76 = tpu.concatenate %36, %49, %62, %75 in 1 : vector<64x1xi32>, vector<64x1xi32>, vector<64x1xi32>, vector<64x1xi32> -> vector<64x4xi32>
    %c0_20 = arith.constant 0 : index
    %c0_21 = arith.constant 0 : index
    %c0_22 = arith.constant 0 : index
    %77 = vector.load %arg4[%c0_20, %c0_21, %c0_22] : memref<1x64x4xi32, #tpu.memory_space<vmem>>, vector<1x64x4xi32>
    %78 = vector.shape_cast %77 : vector<1x64x4xi32> to vector<64x4xi32>
    %79 = vector.shape_cast %76 : vector<64x4xi32> to vector<1x64x4xi32>
    tpu.vector_store %arg4[%c0_20, %c0_21, %c0_22], %79 {strides = array<i32>} : memref<1x64x4xi32, #tpu.memory_space<vmem>>, vector<1x64x4xi32>,
    return
  }
  func.func @transform_0(%arg0: i32, %arg1: i32) -> (i32, i32, i32) {
    %c0_i32 = arith.constant 0 : i32
    %c0_i32_0 = arith.constant 0 : i32
    return %arg0, %arg1, %c0_i32 : i32, i32, i32
  }
  func.func @transform_1(%arg0: i32, %arg1: i32) -> (i32, i32, i32) {
    %c0_i32 = arith.constant 0 : i32
    %c0_i32_0 = arith.constant 0 : i32
    %c0_i32_1 = arith.constant 0 : i32
    return %arg0, %c0_i32, %c0_i32_0 : i32, i32, i32
  }
  func.func @transform_2(%arg0: i32, %arg1: i32) -> (i32, i32, i32) {
    %c0_i32 = arith.constant 0 : i32
    %c0_i32_0 = arith.constant 0 : i32
    return %arg0, %arg1, %c0_i32 : i32, i32, i32
  }
}

</mosaic_0001>

<llo_original>
// kernel: tpu_custom_call.1
$region0: #{tpu_custom_call.1}
  #allocation0 [shape = 'u32[]', space=smem, size = 0x4, offset = 0x4, fixed_abs, tag = 'smem constant byte address 0x4 - core index']
  #allocation1 [shape = 'u32[144,128]{1,0:T(1,128)}', space=vmem, size = 0x12000, scoped, tag = 'internal scratch']
  %s0 = inlined_call_operand.vmem [shape: f32[2,128,3], index: 0, kind: input, shape index: {}]
  %s1 = inlined_call_operand.vmem [shape: f32[2,3,128], index: 1, kind: input, shape index: {}]
  %s2 = inlined_call_operand.vmem [shape: s32[2,128,4], index: 2, kind: output, shape index: {}]
  %s3 = sld [smem:[#allocation0]]
  $region41: #{tpu_custom_call.1} parent=0
    _
  %s5 = ssub.s32 1, %s3
  %s6 = scalar_select 0, %s5, %s3
  loop: start=0, step=1, limit=6
  $region2: #{tpu_custom_call.1} parent=0 // loop_pre_header
    _
  $region3: #{tpu_custom_call.1} parent=0 // loop_header
    %s8 = sphi 0, %s12
    %p9 = scmp.ge.s32.totalorder %s8, 6
    %s15 = sphi 0, %s27
    %s16 = sphi 0, %s23
    %s17 = sphi 0, %s15
    %s18 = sphi 0, %s16
    %s19 = sphi 0, %s17
    %s20 = sphi 0, %s18
    %s32 = sphi 0, %s34
    %s35 = sphi 0, %s32
    %s36 = sphi 0, %s35
    %s52 = sphi 0, %s36
    %s58 = sphi 0, %s60
    %s61 = sphi 0, %s58
    %s62 = sphi 0, %s61
    %s78 = sphi 0, %s62
    %s86 = sphi 0, %s88
    %s89 = sphi 0, %s86
    %s90 = sphi 0, %s89
    %s106 = sphi 0, %s90
  $region4: #{tpu_custom_call.1} parent=0 // loop_header_branch
    %11 = sbr.rel (%p9) target = $region8
  $region5: #{tpu_custom_call.1} parent=0 // loop_body
    %s13 = ssub.s32 %s8, 1
    %s14 = ssub.s32 %s8, 2
    %s21 = sadd.s32 1, %s16
    %p22 = scmp.ge.s32.totalorder %s21, 2
    %s23 = scalar_select %p22, 0, %s21
    %s24 = sadd.s32 1, %s15
    %s25 = scalar_select %p22, %s24, %s15
    %p26 = scmp.ge.s32.totalorder %s25, 2
    %s27 = scalar_select %p26, 0, %s25
    %s28 = ssub.s32 %s15, %s27
    %s29 = ssub.s32 %s16, %s23
    %s30 = sor.u32 %s28, %s29
    %p31 = scmp.eq.s32.totalorder %s30, 0
    %s33 = sadd.s32 %s32, 1
    %s34 = scalar_select %p31, %s32, %s33
    %p37 = pneg %p31
    %p38 = scmp.eq.s32.totalorder %s8, 3
    %p39 = por %p37, %p38
    %p40 = scmp.ne.s32.totalorder %s32, %s35
    %p41 = scmp.eq.s32.totalorder %s8, 0
    %p42 = por %p40, %p41
    %p43 = scmp.ne.s32.totalorder %s32, %s35
    %p44 = scmp.eq.s32.totalorder %s13, 3
    %p45 = por %p43, %p44
    %p46 = scmp.ne.s32.totalorder %s35, %s36
    %p47 = scmp.eq.s32.totalorder %s13, 0
    %p48 = por %p46, %p47
    %p49 = scmp.ne.s32.totalorder %s35, %s36
    %p50 = scmp.eq.s32.totalorder %s14, 3
    %p51 = por %p49, %p50
    %p53 = scmp.ne.s32.totalorder %s36, %s52
    %p54 = scmp.eq.s32.totalorder %s14, 0
    %p55 = por %p53, %p54
    %s56 = ssub.s32 %s15, %s27
    %p57 = scmp.eq.s32.totalorder %s56, 0
    %s59 = sadd.s32 %s58, 1
    %s60 = scalar_select %p57, %s58, %s59
    %p63 = pneg %p57
    %p64 = scmp.eq.s32.totalorder %s8, 3
    %p65 = por %p63, %p64
    %p66 = scmp.ne.s32.totalorder %s58, %s61
    %p67 = scmp.eq.s32.totalorder %s8, 0
    %p68 = por %p66, %p67
    %p69 = scmp.ne.s32.totalorder %s58, %s61
    %p70 = scmp.eq.s32.totalorder %s13, 3
    %p71 = por %p69, %p70
    %p72 = scmp.ne.s32.totalorder %s61, %s62
    %p73 = scmp.eq.s32.totalorder %s13, 0
    %p74 = por %p72, %p73
    %p75 = scmp.ne.s32.totalorder %s61, %s62
    %p76 = scmp.eq.s32.totalorder %s14, 3
    %p77 = por %p75, %p76
    %p79 = scmp.ne.s32.totalorder %s62, %s78
    %p80 = scmp.eq.s32.totalorder %s14, 0
    %p81 = por %p79, %p80
    %s82 = ssub.s32 %s15, %s27
    %s83 = ssub.s32 %s16, %s23
    %s84 = sor.u32 %s82, %s83
    %p85 = scmp.eq.s32.totalorder %s84, 0
    %s87 = sadd.s32 %s86, 1
    %s88 = scalar_select %p85, %s86, %s87
    %p91 = pneg %p85
    %p92 = scmp.eq.s32.totalorder %s8, 3
    %p93 = por %p91, %p92
    %p94 = scmp.ne.s32.totalorder %s86, %s89
    %p95 = scmp.eq.s32.totalorder %s8, 0
    %p96 = por %p94, %p95
    %p97 = scmp.ne.s32.totalorder %s86, %s89
    %p98 = scmp.eq.s32.totalorder %s13, 3
    %p99 = por %p97, %p98
    %p100 = scmp.ne.s32.totalorder %s89, %s90
    %p101 = scmp.eq.s32.totalorder %s13, 0
    %p102 = por %p100, %p101
    %p103 = scmp.ne.s32.totalorder %s89, %s90
    %p104 = scmp.eq.s32.totalorder %s14, 3
    %p105 = por %p103, %p104
    %p107 = scmp.ne.s32.totalorder %s90, %s106
    %p108 = scmp.eq.s32.totalorder %s14, 0
    %p109 = por %p107, %p108
    %p110 = scmp.le.s32.totalorder 1, %s8
    %p111 = scmp.lt.s32.totalorder %s8, 5
    %p112 = pnand %p110, %p111
    %p113 = pneg %p112
    // Predicated region
    $region9: #{tpu_custom_call.1} parent=5 // pred_check
      _
    $region10: #{tpu_custom_call.1} parent=5 // pred_check_branch
      %115 = sbr.rel (%p112) target = $region12
    $region11: #{tpu_custom_call.1} parent=5 // pred_region
      %s116 = ssub.s32 %s8, 1
    $region12: #{tpu_custom_call.1} parent=5 // pred_fallthru
      _
    %p117 = scmp.lt.s32.totalorder %s8, 4
    // Predicated region
    $region13: #{tpu_custom_call.1} parent=5 // pred_check
      %p118 = pneg %p117
    $region14: #{tpu_custom_call.1} parent=5 // pred_check_branch
      %120 = sbr.rel (%p118) target = $region16
    $region15: #{tpu_custom_call.1} parent=5 // pred_region
      // Predicated region
      $region17: #{tpu_custom_call.1} parent=15 // pred_check
        %p121 = pneg %p42
      $region18: #{tpu_custom_call.1} parent=15 // pred_check_branch
        %123 = sbr.rel (%p121) target = $region20
      $region19: #{tpu_custom_call.1} parent=15 // pred_region
        %s124 = smul.u32 8, %s16
        %p125 = scmp.lt.s32.totalorder %s15, 1
        %s126 = scalar_select %p125, %s15, 1
        %p127 = scmp.lt.s32.totalorder %s124, 15
        %s128 = scalar_select %p127, %s124, 15
        %s129 = smul.addr %s126, 16
        %s130 = sadd.s32 %s128, %s129
        %s131 = smul.addr %s130, 8
        %s132 = scalar_lea.vmem %s0, %s131
        %s133 = smul.u32 8, %s16
      $region20: #{tpu_custom_call.1} parent=15 // pred_fallthru
        _
      // Predicated region
      $region21: #{tpu_custom_call.1} parent=15 // pred_check
        %p134 = pneg %p68
      $region22: #{tpu_custom_call.1} parent=15 // pred_check_branch
        %136 = sbr.rel (%p134) target = $region24
      $region23: #{tpu_custom_call.1} parent=15 // pred_region
        %p137 = scmp.lt.s32.totalorder %s15, 1
        %s138 = scalar_select %p137, %s15, 1
        %s139 = smul.addr %s138, 4
        %s140 = scalar_lea.vmem %s1, %s139
      $region24: #{tpu_custom_call.1} parent=15 // pred_fallthru
        _
    $region16: #{tpu_custom_call.1} parent=5 // pred_fallthru
      _
    %p141 = scmp.le.s32.totalorder 1, %s8
    %p142 = scmp.lt.s32.totalorder %s8, 5
    %p143 = pnand %p141, %p142
    %p144 = pneg %p143
    // Predicated region
    $region25: #{tpu_custom_call.1} parent=5 // pred_check
      _
    $region26: #{tpu_custom_call.1} parent=5 // pred_check_branch
      %146 = sbr.rel (%p143) target = $region28
    $region27: #{tpu_custom_call.1} parent=5 // pred_region
      %s147 = ssub.s32 %s8, 1
      %s148 = smul.u32 8, %s18
      %p149 = scmp.lt.s32.totalorder %s17, 1
      %s150 = scalar_select %p149, %s17, 1
      %p151 = scmp.lt.s32.totalorder %s148, 15
      %s152 = scalar_select %p151, %s148, 15
      %s153 = smul.addr %s150, 16
      %s154 = sadd.s32 %s152, %s153
      %s155 = smul.addr %s154, 8
      %s156 = scalar_lea.vmem %s0, %s155
      %p157 = pneg %p48
      %p158 = pneg %p45
      %p159 = scmp.lt.s32.totalorder %s17, 1
      %s160 = scalar_select %p159, %s17, 1
      %s161 = smul.addr %s160, 4
      %s162 = scalar_lea.vmem %s1, %s161
      %p163 = pneg %p74
      %p164 = pneg %p71
      %p165 = pneg %p102
      %p166 = pneg %p99
      %s167 = smul.u32 8, %s18
      %p168 = scmp.lt.s32.totalorder %s17, 1
      %s169 = scalar_select %p168, %s17, 1
      %p170 = scmp.lt.s32.totalorder %s167, 15
      %s171 = scalar_select %p170, %s167, 15
      %s172 = smul.addr %s169, 16
      %s173 = sadd.s32 %s171, %s172
      %s174 = smul.addr %s173, 8
      %s175 = scalar_lea.vmem %s2, %s174
      %s176 = smul.u32 8, %s18
      %p177 = scmp.lt.s32.totalorder %s17, 1
      %s178 = scalar_select %p177, %s17, 1
      %p179 = scmp.lt.s32.totalorder %s176, 15
      %s180 = scalar_select %p179, %s176, 15
      %s181 = smul.addr %s178, 16
      %s182 = sadd.s32 %s180, %s181
      %s183 = smul.addr %s182, 8
      %s184 = scalar_lea.vmem %s0, %s183
      %s185 = smul.u32 8, %s18
      %p186 = scmp.lt.s32.totalorder %s17, 1
      %s187 = scalar_select %p186, %s17, 1
      %s188 = smul.addr %s187, 4
      %s189 = scalar_lea.vmem %s1, %s188
      %s190 = smul.u32 8, %s18
      %p191 = scmp.lt.s32.totalorder %s17, 1
      %s192 = scalar_select %p191, %s17, 1
      %p193 = scmp.lt.s32.totalorder %s190, 15
      %s194 = scalar_select %p193, %s190, 15
      %s195 = smul.addr %s192, 16
      %s196 = sadd.s32 %s194, %s195
      %s197 = smul.addr %s196, 8
      %s198 = scalar_lea.vmem %s2, %s197
      %s199 = smul.u32 8, %s18
      %v200 = vld [vmem:[%s184] sm:$0xff]
      %v201 = vld [vmem:[%s184 + $0x8] sm:$0xff]
      %v202 = vld [vmem:[%s184 + $0x10] sm:$0xff]
      %v203 = vld [vmem:[%s184 + $0x18] sm:$0xff]
      %v204 = vld [vmem:[%s184 + $0x20] sm:$0xff]
      %v205 = vld [vmem:[%s184 + $0x28] sm:$0xff]
      %v206 = vld [vmem:[%s184 + $0x30] sm:$0xff]
      %v207 = vld [vmem:[%s184 + $0x38] sm:$0xff]
      %v208 = vld [vmem:[%s189] sm:$0x7]
      %210 = vset.pattern.permute.xlu0 0
      %211 = vperm.xlu0 %210, %v200
      %v212 = vpop.permute.xlu0 %211
      %215 = vset.pattern.permute.xlu0 0
      %216 = vperm.xlu0 %215, %v201
      %v217 = vpop.permute.xlu0 %216
      %220 = vset.pattern.permute.xlu0 0
      %221 = vperm.xlu0 %220, %v202
      %v222 = vpop.permute.xlu0 %221
      %225 = vset.pattern.permute.xlu0 0
      %226 = vperm.xlu0 %225, %v203
      %v227 = vpop.permute.xlu0 %226
      %230 = vset.pattern.permute.xlu0 0
      %231 = vperm.xlu0 %230, %v204
      %v232 = vpop.permute.xlu0 %231
      %235 = vset.pattern.permute.xlu0 0
      %236 = vperm.xlu0 %235, %v205
      %v237 = vpop.permute.xlu0 %236
      %240 = vset.pattern.permute.xlu0 0
      %241 = vperm.xlu0 %240, %v206
      %v242 = vpop.permute.xlu0 %241
      %245 = vset.pattern.permute.xlu0 0
      %246 = vperm.xlu0 %245, %v207
      %v247 = vpop.permute.xlu0 %246
      %v249 = vlaneseq
      %v250 = vshrl.u32 %v249, 7
      %v251 = vsub.s32 0, %v250
      %v252 = vrot.slane %v208, %v251
      %v253 = vsub.f32 %v212, %v252
      %v254 = vsub.f32 %v217, %v252
      %v255 = vsub.f32 %v222, %v252
      %v256 = vsub.f32 %v227, %v252
      %v257 = vsub.f32 %v232, %v252
      %v258 = vsub.f32 %v237, %v252
      %v259 = vsub.f32 %v242, %v252
      %v260 = vsub.f32 %v247, %v252
      %v261 = vmul.f32 %v253, %v253
      %v262 = vmul.f32 %v254, %v254
      %v263 = vmul.f32 %v255, %v255
      %v264 = vmul.f32 %v256, %v256
      %v265 = vmul.f32 %v257, %v257
      %v266 = vmul.f32 %v258, %v258
      %v267 = vmul.f32 %v259, %v259
      %v268 = vmul.f32 %v260, %v260
      %269 = vset.pattern.permute.xlu0 1
      %270 = vperm.xlu0 %269, %v200
      %v271 = vpop.permute.xlu0 %270
      %273 = vset.pattern.permute.xlu0 1
      %274 = vperm.xlu0 %273, %v201
      %v275 = vpop.permute.xlu0 %274
      %277 = vset.pattern.permute.xlu0 1
      %278 = vperm.xlu0 %277, %v202
      %v279 = vpop.permute.xlu0 %278
      %281 = vset.pattern.permute.xlu0 1
      %282 = vperm.xlu0 %281, %v203
      %v283 = vpop.permute.xlu0 %282
      %285 = vset.pattern.permute.xlu0 1
      %286 = vperm.xlu0 %285, %v204
      %v287 = vpop.permute.xlu0 %286
      %289 = vset.pattern.permute.xlu0 1
      %290 = vperm.xlu0 %289, %v205
      %v291 = vpop.permute.xlu0 %290
      %293 = vset.pattern.permute.xlu0 1
      %294 = vperm.xlu0 %293, %v206
      %v295 = vpop.permute.xlu0 %294
      %297 = vset.pattern.permute.xlu0 1
      %298 = vperm.xlu0 %297, %v207
      %v299 = vpop.permute.xlu0 %298
      %v301 = vlaneseq
      %v302 = vshrl.u32 %v301, 7
      %v303 = vsub.s32 1, %v302
      %v304 = vrot.slane %v208, %v303
      %v305 = vsub.f32 %v271, %v304
      %v306 = vsub.f32 %v275, %v304
      %v307 = vsub.f32 %v279, %v304
      %v308 = vsub.f32 %v283, %v304
      %v309 = vsub.f32 %v287, %v304
      %v310 = vsub.f32 %v291, %v304
      %v311 = vsub.f32 %v295, %v304
      %v312 = vsub.f32 %v299, %v304
      %v313 = vmul.f32 %v305, %v305
      %v314 = vmul.f32 %v306, %v306
      %v315 = vmul.f32 %v307, %v307
      %v316 = vmul.f32 %v308, %v308
      %v317 = vmul.f32 %v309, %v309
      %v318 = vmul.f32 %v310, %v310
      %v319 = vmul.f32 %v311, %v311
      %v320 = vmul.f32 %v312, %v312
      %v321 = vadd.f32 %v261, %v313
      %v322 = vadd.f32 %v262, %v314
      %v323 = vadd.f32 %v263, %v315
      %v324 = vadd.f32 %v264, %v316
      %v325 = vadd.f32 %v265, %v317
      %v326 = vadd.f32 %v266, %v318
      %v327 = vadd.f32 %v267, %v319
      %v328 = vadd.f32 %v268, %v320
      %329 = vset.pattern.permute.xlu0 2
      %330 = vperm.xlu0 %329, %v200
      %v331 = vpop.permute.xlu0 %330
      %333 = vset.pattern.permute.xlu0 2
      %334 = vperm.xlu0 %333, %v201
      %v335 = vpop.permute.xlu0 %334
      %337 = vset.pattern.permute.xlu0 2
      %338 = vperm.xlu0 %337, %v202
      %v339 = vpop.permute.xlu0 %338
      %341 = vset.pattern.permute.xlu0 2
      %342 = vperm.xlu0 %341, %v203
      %v343 = vpop.permute.xlu0 %342
      %345 = vset.pattern.permute.xlu0 2
      %346 = vperm.xlu0 %345, %v204
      %v347 = vpop.permute.xlu0 %346
      %349 = vset.pattern.permute.xlu0 2
      %350 = vperm.xlu0 %349, %v205
      %v351 = vpop.permute.xlu0 %350
      %353 = vset.pattern.permute.xlu0 2
      %354 = vperm.xlu0 %353, %v206
      %v355 = vpop.permute.xlu0 %354
      %357 = vset.pattern.permute.xlu0 2
      %358 = vperm.xlu0 %357, %v207
      %v359 = vpop.permute.xlu0 %358
      %v361 = vlaneseq
      %v362 = vshrl.u32 %v361, 7
      %v363 = vsub.s32 2, %v362
      %v364 = vrot.slane %v208, %v363
      %v365 = vsub.f32 %v331, %v364
      %v366 = vsub.f32 %v335, %v364
      %v367 = vsub.f32 %v339, %v364
      %v368 = vsub.f32 %v343, %v364
      %v369 = vsub.f32 %v347, %v364
      %v370 = vsub.f32 %v351, %v364
      %v371 = vsub.f32 %v355, %v364
      %v372 = vsub.f32 %v359, %v364
      %v373 = vmul.f32 %v365, %v365
      %v374 = vmul.f32 %v366, %v366
      %v375 = vmul.f32 %v367, %v367
      %v376 = vmul.f32 %v368, %v368
      %v377 = vmul.f32 %v369, %v369
      %v378 = vmul.f32 %v370, %v370
      %v379 = vmul.f32 %v371, %v371
      %v380 = vmul.f32 %v372, %v372
      %v381 = vadd.f32 %v321, %v373
      %v382 = vadd.f32 %v322, %v374
      %v383 = vadd.f32 %v323, %v375
      %v384 = vadd.f32 %v324, %v376
      %v385 = vadd.f32 %v325, %v377
      %v386 = vadd.f32 %v326, %v378
      %v387 = vadd.f32 %v327, %v379
      %v388 = vadd.f32 %v328, %v380
      %v389 = vsub.f32 0.0, %v381
      %v390 = vsub.f32 0.0, %v382
      %v391 = vsub.f32 0.0, %v383
      %v392 = vsub.f32 0.0, %v384
      %v393 = vsub.f32 0.0, %v385
      %v394 = vsub.f32 0.0, %v386
      %v395 = vsub.f32 0.0, %v387
      %v396 = vsub.f32 0.0, %v388
      %v397 = vlaneseq
      %v398 = vand.u32 %v397, 127
      %v399 = vcvt.s32.f32 %v398
      %400 = vmax.xlane.f32.xlu0 %v389
      %v401 = vpop.xlane.xlu0 %400
      %402 = vmax.xlane.f32.xlu0 %v390
      %v403 = vpop.xlane.xlu0 %402
      %404 = vmax.xlane.f32.xlu0 %v391
      %v405 = vpop.xlane.xlu0 %404
      %406 = vmax.xlane.f32.xlu0 %v392
      %v407 = vpop.xlane.xlu0 %406
      %408 = vmax.xlane.f32.xlu0 %v393
      %v409 = vpop.xlane.xlu0 %408
      %410 = vmax.xlane.f32.xlu0 %v394
      %v411 = vpop.xlane.xlu0 %410
      %412 = vmax.xlane.f32.xlu0 %v395
      %v413 = vpop.xlane.xlu0 %412
      %414 = vmax.xlane.f32.xlu0 %v396
      %v415 = vpop.xlane.xlu0 %414
      %vm416 = vcmp.eq.f32.partialorder %v389, %v401
      %vm417 = vcmp.eq.f32.partialorder %v390, %v403
      %vm418 = vcmp.eq.f32.partialorder %v391, %v405
      %vm419 = vcmp.eq.f32.partialorder %v392, %v407
      %vm420 = vcmp.eq.f32.partialorder %v393, %v409
      %vm421 = vcmp.eq.f32.partialorder %v394, %v411
      %vm422 = vcmp.eq.f32.partialorder %v395, %v413
      %vm423 = vcmp.eq.f32.partialorder %v396, %v415
      %v424 = vsel %vm416, %v399, 128.0
      %v425 = vsel %vm417, %v399, 128.0
      %v426 = vsel %vm418, %v399, 128.0
      %v427 = vsel %vm419, %v399, 128.0
      %v428 = vsel %vm420, %v399, 128.0
      %v429 = vsel %vm421, %v399, 128.0
      %v430 = vsel %vm422, %v399, 128.0
      %v431 = vsel %vm423, %v399, 128.0
      %432 = vmin.xlane.f32.xlu0 %v424
      %v433 = vpop.xlane.xlu0 %432
      %434 = vmin.xlane.f32.xlu0 %v425
      %v435 = vpop.xlane.xlu0 %434
      %436 = vmin.xlane.f32.xlu0 %v426
      %v437 = vpop.xlane.xlu0 %436
      %438 = vmin.xlane.f32.xlu0 %v427
      %v439 = vpop.xlane.xlu0 %438
      %440 = vmin.xlane.f32.xlu0 %v428
      %v441 = vpop.xlane.xlu0 %440
      %442 = vmin.xlane.f32.xlu0 %v429
      %v443 = vpop.xlane.xlu0 %442
      %444 = vmin.xlane.f32.xlu0 %v430
      %v445 = vpop.xlane.xlu0 %444
      %446 = vmin.xlane.f32.xlu0 %v431
      %v447 = vpop.xlane.xlu0 %446
      %v448 = vcvt.f32.s32.to.zero.pseudo %v433
      %v449 = vcvt.f32.s32.to.zero.pseudo %v435
      %v450 = vcvt.f32.s32.to.zero.pseudo %v437
      %v451 = vcvt.f32.s32.to.zero.pseudo %v439
      %v452 = vcvt.f32.s32.to.zero.pseudo %v441
      %v453 = vcvt.f32.s32.to.zero.pseudo %v443
      %v454 = vcvt.f32.s32.to.zero.pseudo %v445
      %v455 = vcvt.f32.s32.to.zero.pseudo %v447
      %vm456 = vcmp.eq.f32.partialorder %v399, %v433
      %vm457 = vcmp.eq.f32.partialorder %v399, %v435
      %vm458 = vcmp.eq.f32.partialorder %v399, %v437
      %vm459 = vcmp.eq.f32.partialorder %v399, %v439
      %vm460 = vcmp.eq.f32.partialorder %v399, %v441
      %vm461 = vcmp.eq.f32.partialorder %v399, %v443
      %vm462 = vcmp.eq.f32.partialorder %v399, %v445
      %vm463 = vcmp.eq.f32.partialorder %v399, %v447
      %v464 = vsel %vm456, -1e+30, %v389
      %v465 = vsel %vm457, -1e+30, %v390
      %v466 = vsel %vm458, -1e+30, %v391
      %v467 = vsel %vm459, -1e+30, %v392
      %v468 = vsel %vm460, -1e+30, %v393
      %v469 = vsel %vm461, -1e+30, %v394
      %v470 = vsel %vm462, -1e+30, %v395
      %v471 = vsel %vm463, -1e+30, %v396
      %472 = vmax.xlane.f32.xlu0 %v464
      %v473 = vpop.xlane.xlu0 %472
      %474 = vmax.xlane.f32.xlu0 %v465
      %v475 = vpop.xlane.xlu0 %474
      %476 = vmax.xlane.f32.xlu0 %v466
      %v477 = vpop.xlane.xlu0 %476
      %478 = vmax.xlane.f32.xlu0 %v467
      %v479 = vpop.xlane.xlu0 %478
      %480 = vmax.xlane.f32.xlu0 %v468
      %v481 = vpop.xlane.xlu0 %480
      %482 = vmax.xlane.f32.xlu0 %v469
      %v483 = vpop.xlane.xlu0 %482
      %484 = vmax.xlane.f32.xlu0 %v470
      %v485 = vpop.xlane.xlu0 %484
      %486 = vmax.xlane.f32.xlu0 %v471
      %v487 = vpop.xlane.xlu0 %486
      %vm488 = vcmp.eq.f32.partialorder %v464, %v473
      %vm489 = vcmp.eq.f32.partialorder %v465, %v475
      %vm490 = vcmp.eq.f32.partialorder %v466, %v477
      %vm491 = vcmp.eq.f32.partialorder %v467, %v479
      %vm492 = vcmp.eq.f32.partialorder %v468, %v481
      %vm493 = vcmp.eq.f32.partialorder %v469, %v483
      %vm494 = vcmp.eq.f32.partialorder %v470, %v485
      %vm495 = vcmp.eq.f32.partialorder %v471, %v487
      %v496 = vsel %vm488, %v399, 128.0
      %v497 = vsel %vm489, %v399, 128.0
      %v498 = vsel %vm490, %v399, 128.0
      %v499 = vsel %vm491, %v399, 128.0
      %v500 = vsel %vm492, %v399, 128.0
      %v501 = vsel %vm493, %v399, 128.0
      %v502 = vsel %vm494, %v399, 128.0
      %v503 = vsel %vm495, %v399, 128.0
      %504 = vmin.xlane.f32.xlu0 %v496
      %v505 = vpop.xlane.xlu0 %504
      %506 = vmin.xlane.f32.xlu0 %v497
      %v507 = vpop.xlane.xlu0 %506
      %508 = vmin.xlane.f32.xlu0 %v498
      %v509 = vpop.xlane.xlu0 %508
      %510 = vmin.xlane.f32.xlu0 %v499
      %v511 = vpop.xlane.xlu0 %510
      %512 = vmin.xlane.f32.xlu0 %v500
      %v513 = vpop.xlane.xlu0 %512
      %514 = vmin.xlane.f32.xlu0 %v501
      %v515 = vpop.xlane.xlu0 %514
      %516 = vmin.xlane.f32.xlu0 %v502
      %v517 = vpop.xlane.xlu0 %516
      %518 = vmin.xlane.f32.xlu0 %v503
      %v519 = vpop.xlane.xlu0 %518
      %v520 = vcvt.f32.s32.to.zero.pseudo %v505
      %v521 = vcvt.f32.s32.to.zero.pseudo %v507
      %v522 = vcvt.f32.s32.to.zero.pseudo %v509
      %v523 = vcvt.f32.s32.to.zero.pseudo %v511
      %v524 = vcvt.f32.s32.to.zero.pseudo %v513
      %v525 = vcvt.f32.s32.to.zero.pseudo %v515
      %v526 = vcvt.f32.s32.to.zero.pseudo %v517
      %v527 = vcvt.f32.s32.to.zero.pseudo %v519
      %vm528 = vcmp.eq.f32.partialorder %v399, %v505
      %vm529 = vcmp.eq.f32.partialorder %v399, %v507
      %vm530 = vcmp.eq.f32.partialorder %v399, %v509
      %vm531 = vcmp.eq.f32.partialorder %v399, %v511
      %vm532 = vcmp.eq.f32.partialorder %v399, %v513
      %vm533 = vcmp.eq.f32.partialorder %v399, %v515
      %vm534 = vcmp.eq.f32.partialorder %v399, %v517
      %vm535 = vcmp.eq.f32.partialorder %v399, %v519
      %v536 = vsel %vm528, -1e+30, %v464
      %v537 = vsel %vm529, -1e+30, %v465
      %v538 = vsel %vm530, -1e+30, %v466
      %v539 = vsel %vm531, -1e+30, %v467
      %v540 = vsel %vm532, -1e+30, %v468
      %v541 = vsel %vm533, -1e+30, %v469
      %v542 = vsel %vm534, -1e+30, %v470
      %v543 = vsel %vm535, -1e+30, %v471
      %544 = vmax.xlane.f32.xlu0 %v536
      %v545 = vpop.xlane.xlu0 %544
      %546 = vmax.xlane.f32.xlu0 %v537
      %v547 = vpop.xlane.xlu0 %546
      %548 = vmax.xlane.f32.xlu0 %v538
      %v549 = vpop.xlane.xlu0 %548
      %550 = vmax.xlane.f32.xlu0 %v539
      %v551 = vpop.xlane.xlu0 %550
      %552 = vmax.xlane.f32.xlu0 %v540
      %v553 = vpop.xlane.xlu0 %552
      %554 = vmax.xlane.f32.xlu0 %v541
      %v555 = vpop.xlane.xlu0 %554
      %556 = vmax.xlane.f32.xlu0 %v542
      %v557 = vpop.xlane.xlu0 %556
      %558 = vmax.xlane.f32.xlu0 %v543
      %v559 = vpop.xlane.xlu0 %558
      %vm560 = vcmp.eq.f32.partialorder %v536, %v545
      %vm561 = vcmp.eq.f32.partialorder %v537, %v547
      %vm562 = vcmp.eq.f32.partialorder %v538, %v549
      %vm563 = vcmp.eq.f32.partialorder %v539, %v551
      %vm564 = vcmp.eq.f32.partialorder %v540, %v553
      %vm565 = vcmp.eq.f32.partialorder %v541, %v555
      %vm566 = vcmp.eq.f32.partialorder %v542, %v557
      %vm567 = vcmp.eq.f32.partialorder %v543, %v559
      %v568 = vsel %vm560, %v399, 128.0
      %v569 = vsel %vm561, %v399, 128.0
      %v570 = vsel %vm562, %v399, 128.0
      %v571 = vsel %vm563, %v399, 128.0
      %v572 = vsel %vm564, %v399, 128.0
      %v573 = vsel %vm565, %v399, 128.0
      %v574 = vsel %vm566, %v399, 128.0
      %v575 = vsel %vm567, %v399, 128.0
      %576 = vmin.xlane.f32.xlu0 %v568
      %v577 = vpop.xlane.xlu0 %576
      %578 = vmin.xlane.f32.xlu0 %v569
      %v579 = vpop.xlane.xlu0 %578
      %580 = vmin.xlane.f32.xlu0 %v570
      %v581 = vpop.xlane.xlu0 %580
      %582 = vmin.xlane.f32.xlu0 %v571
      %v583 = vpop.xlane.xlu0 %582
      %584 = vmin.xlane.f32.xlu0 %v572
      %v585 = vpop.xlane.xlu0 %584
      %586 = vmin.xlane.f32.xlu0 %v573
      %v587 = vpop.xlane.xlu0 %586
      %588 = vmin.xlane.f32.xlu0 %v574
      %v589 = vpop.xlane.xlu0 %588
      %590 = vmin.xlane.f32.xlu0 %v575
      %v591 = vpop.xlane.xlu0 %590
      %v592 = vcvt.f32.s32.to.zero.pseudo %v577
      %v593 = vcvt.f32.s32.to.zero.pseudo %v579
      %v594 = vcvt.f32.s32.to.zero.pseudo %v581
      %v595 = vcvt.f32.s32.to.zero.pseudo %v583
      %v596 = vcvt.f32.s32.to.zero.pseudo %v585
      %v597 = vcvt.f32.s32.to.zero.pseudo %v587
      %v598 = vcvt.f32.s32.to.zero.pseudo %v589
      %v599 = vcvt.f32.s32.to.zero.pseudo %v591
      %vm600 = vcmp.eq.f32.partialorder %v399, %v577
      %vm601 = vcmp.eq.f32.partialorder %v399, %v579
      %vm602 = vcmp.eq.f32.partialorder %v399, %v581
      %vm603 = vcmp.eq.f32.partialorder %v399, %v583
      %vm604 = vcmp.eq.f32.partialorder %v399, %v585
      %vm605 = vcmp.eq.f32.partialorder %v399, %v587
      %vm606 = vcmp.eq.f32.partialorder %v399, %v589
      %vm607 = vcmp.eq.f32.partialorder %v399, %v591
      %v608 = vsel %vm600, -1e+30, %v536
      %v609 = vsel %vm601, -1e+30, %v537
      %v610 = vsel %vm602, -1e+30, %v538
      %v611 = vsel %vm603, -1e+30, %v539
      %v612 = vsel %vm604, -1e+30, %v540
      %v613 = vsel %vm605, -1e+30, %v541
      %v614 = vsel %vm606, -1e+30, %v542
      %v615 = vsel %vm607, -1e+30, %v543
      %616 = vmax.xlane.f32.xlu0 %v608
      %v617 = vpop.xlane.xlu0 %616
      %618 = vmax.xlane.f32.xlu0 %v609
      %v619 = vpop.xlane.xlu0 %618
      %620 = vmax.xlane.f32.xlu0 %v610
      %v621 = vpop.xlane.xlu0 %620
      %622 = vmax.xlane.f32.xlu0 %v611
      %v623 = vpop.xlane.xlu0 %622
      %624 = vmax.xlane.f32.xlu0 %v612
      %v625 = vpop.xlane.xlu0 %624
      %626 = vmax.xlane.f32.xlu0 %v613
      %v627 = vpop.xlane.xlu0 %626
      %628 = vmax.xlane.f32.xlu0 %v614
      %v629 = vpop.xlane.xlu0 %628
      %630 = vmax.xlane.f32.xlu0 %v615
      %v631 = vpop.xlane.xlu0 %630
      %vm632 = vcmp.eq.f32.partialorder %v608, %v617
      %vm633 = vcmp.eq.f32.partialorder %v609, %v619
      %vm634 = vcmp.eq.f32.partialorder %v610, %v621
      %vm635 = vcmp.eq.f32.partialorder %v611, %v623
      %vm636 = vcmp.eq.f32.partialorder %v612, %v625
      %vm637 = vcmp.eq.f32.partialorder %v613, %v627
      %vm638 = vcmp.eq.f32.partialorder %v614, %v629
      %vm639 = vcmp.eq.f32.partialorder %v615, %v631
      %v640 = vsel %vm632, %v399, 128.0
      %v641 = vsel %vm633, %v399, 128.0
      %v642 = vsel %vm634, %v399, 128.0
      %v643 = vsel %vm635, %v399, 128.0
      %v644 = vsel %vm636, %v399, 128.0
      %v645 = vsel %vm637, %v399, 128.0
      %v646 = vsel %vm638, %v399, 128.0
      %v647 = vsel %vm639, %v399, 128.0
      %648 = vmin.xlane.f32.xlu0 %v640
      %v649 = vpop.xlane.xlu0 %648
      %650 = vmin.xlane.f32.xlu0 %v641
      %v651 = vpop.xlane.xlu0 %650
      %652 = vmin.xlane.f32.xlu0 %v642
      %v653 = vpop.xlane.xlu0 %652
      %654 = vmin.xlane.f32.xlu0 %v643
      %v655 = vpop.xlane.xlu0 %654
      %656 = vmin.xlane.f32.xlu0 %v644
      %v657 = vpop.xlane.xlu0 %656
      %658 = vmin.xlane.f32.xlu0 %v645
      %v659 = vpop.xlane.xlu0 %658
      %660 = vmin.xlane.f32.xlu0 %v646
      %v661 = vpop.xlane.xlu0 %660
      %662 = vmin.xlane.f32.xlu0 %v647
      %v663 = vpop.xlane.xlu0 %662
      %v664 = vcvt.f32.s32.to.zero.pseudo %v649
      %v665 = vcvt.f32.s32.to.zero.pseudo %v651
      %v666 = vcvt.f32.s32.to.zero.pseudo %v653
      %v667 = vcvt.f32.s32.to.zero.pseudo %v655
      %v668 = vcvt.f32.s32.to.zero.pseudo %v657
      %v669 = vcvt.f32.s32.to.zero.pseudo %v659
      %v670 = vcvt.f32.s32.to.zero.pseudo %v661
      %v671 = vcvt.f32.s32.to.zero.pseudo %v663
      %vm672 = vcmask 7168
      %v673 = vsel %vm672, %v448, %v520
      %v674 = vsel %vm672, %v449, %v521
      %v675 = vsel %vm672, %v450, %v522
      %v676 = vsel %vm672, %v451, %v523
      %v677 = vsel %vm672, %v452, %v524
      %v678 = vsel %vm672, %v453, %v525
      %v679 = vsel %vm672, %v454, %v526
      %v680 = vsel %vm672, %v455, %v527
      %vm681 = vcmask 15360
      %v682 = vsel %vm681, %v673, %v592
      %v683 = vsel %vm681, %v674, %v593
      %v684 = vsel %vm681, %v675, %v594
      %v685 = vsel %vm681, %v676, %v595
      %v686 = vsel %vm681, %v677, %v596
      %v687 = vsel %vm681, %v678, %v597
      %v688 = vsel %vm681, %v679, %v598
      %v689 = vsel %vm681, %v680, %v599
      %vm690 = vcmask 23552
      %v691 = vsel %vm690, %v682, %v664
      %v692 = vsel %vm690, %v683, %v665
      %v693 = vsel %vm690, %v684, %v666
      %v694 = vsel %vm690, %v685, %v667
      %v695 = vsel %vm690, %v686, %v668
      %v696 = vsel %vm690, %v687, %v669
      %v697 = vsel %vm690, %v688, %v670
      %v698 = vsel %vm690, %v689, %v671
      %vm699 = vcmask 31744
      %700 = vst.msk [vmem:[%s198] sm:$0xff] %vm699, %v691
      %701 = vst.msk [vmem:[%s198 + $0x8] sm:$0xff] %vm699, %v692
      %702 = vst.msk [vmem:[%s198 + $0x10] sm:$0xff] %vm699, %v693
      %703 = vst.msk [vmem:[%s198 + $0x18] sm:$0xff] %vm699, %v694
      %704 = vst.msk [vmem:[%s198 + $0x20] sm:$0xff] %vm699, %v695
      %705 = vst.msk [vmem:[%s198 + $0x28] sm:$0xff] %vm699, %v696
      %706 = vst.msk [vmem:[%s198 + $0x30] sm:$0xff] %vm699, %v697
      %707 = vst.msk [vmem:[%s198 + $0x38] sm:$0xff] %vm699, %v698
      %s708 = smul.u32 8, %s18
      %p709 = scmp.lt.s32.totalorder %s17, 1
      %s710 = scalar_select %p709, %s17, 1
      %p711 = scmp.lt.s32.totalorder %s708, 15
      %s712 = scalar_select %p711, %s708, 15
      %s713 = smul.addr %s710, 16
      %s714 = sadd.s32 %s712, %s713
      %s715 = smul.addr %s714, 8
      %s716 = scalar_lea.vmem %s2, %s715
      // Predicated region
      $region29: #{tpu_custom_call.1} parent=27 // pred_check
        %p717 = pneg %p99
      $region30: #{tpu_custom_call.1} parent=27 // pred_check_branch
        %719 = sbr.rel (%p717) target = $region32
      $region31: #{tpu_custom_call.1} parent=27 // pred_region
        %s720 = smul.u32 8, %s18
      $region32: #{tpu_custom_call.1} parent=27 // pred_fallthru
        _
    $region28: #{tpu_custom_call.1} parent=5 // pred_fallthru
      _
    %p721 = scmp.le.s32.totalorder 2, %s8
    // Predicated region
    $region33: #{tpu_custom_call.1} parent=5 // pred_check
      %p722 = pneg %p721
    $region34: #{tpu_custom_call.1} parent=5 // pred_check_branch
      %724 = sbr.rel (%p722) target = $region36
    $region35: #{tpu_custom_call.1} parent=5 // pred_region
      %s725 = ssub.s32 %s8, 2
      // Predicated region
      $region37: #{tpu_custom_call.1} parent=35 // pred_check
        %p726 = pneg %p105
      $region38: #{tpu_custom_call.1} parent=35 // pred_check_branch
        %728 = sbr.rel (%p726) target = $region40
      $region39: #{tpu_custom_call.1} parent=35 // pred_region
        %s729 = smul.u32 8, %s20
        %p730 = scmp.lt.s32.totalorder %s19, 1
        %s731 = scalar_select %p730, %s19, 1
        %p732 = scmp.lt.s32.totalorder %s729, 15
        %s733 = scalar_select %p732, %s729, 15
        %s734 = smul.addr %s731, 16
        %s735 = sadd.s32 %s733, %s734
        %s736 = smul.addr %s735, 8
        %s737 = scalar_lea.vmem %s2, %s736
      $region40: #{tpu_custom_call.1} parent=35 // pred_fallthru
        _
    $region36: #{tpu_custom_call.1} parent=5 // pred_fallthru
      _
  $region6: #{tpu_custom_call.1} parent=0 // loop_footer
    %s12 = sadd.s32 1, %s8
  $region7: #{tpu_custom_call.1} parent=0 // loop_footer_branch
    %7 = sbr.rel target = $region3
  $region8: #{tpu_custom_call.1} parent=0 // loop_exit
    _

</llo_original>
